<compile_context>
chip_gen: v5e
topology: v5e:2x2
jax: 0.10.0
libtpu: 0.0.40
codegen_flags: <defaults>
</compile_context>

<pallas_src>
import functools

import numpy as np
import jax
import jax.numpy as jnp
from jax.experimental import pallas as pl
from jax.experimental.pallas import tpu as pltpu


# ---------------------------------------------------------------------------
# Kernels
# ---------------------------------------------------------------------------

def _fused_kernel(hw_total, x_ref, ws_ref, w1_ref, b1_ref, w2_ref, b2_ref, o_ref):
    """Single pass per batch element: read x once, write out once (~2x HBM traffic)."""
    x = x_ref[0]                                                         # (C, HWp), native dtype
    # Channel branch: global mean via an MXU reduction (f32 accumulate, no f32 copy of x).
    ones = jnp.ones((x.shape[-1], 1), dtype=x.dtype)
    csum = jnp.dot(x, ones, preferred_element_type=jnp.float32)          # (C, 1)
    mean = csum * (1.0 / hw_total)
    z = jnp.dot(w1_ref[...], mean, preferred_element_type=jnp.float32) + b1_ref[...]
    z = jnp.maximum(z, 0.0)
    g = jax.nn.sigmoid(
        jnp.dot(w2_ref[...], z, preferred_element_type=jnp.float32) + b2_ref[...])   # (C, 1)
    # Spatial branch: (1,C)x(C,HWp) on the MXU, sigmoid in f32.
    s = jax.nn.sigmoid(
        jnp.dot(ws_ref[...], x, preferred_element_type=jnp.float32))     # (1, HWp)
    # out = x * (s + g); broadcast-add in the input dtype (single full-tile temp).
    scale = s.astype(x.dtype) + g.astype(x.dtype)                        # (C, HWp)
    o_ref[0] = (x * scale).astype(o_ref.dtype)


def _gate_kernel(hw_total, x_ref, w1_ref, b1_ref, w2_ref, b2_ref, g_ref, acc_ref):
    """Two-pass path, pass 1: g[b,c] = sigmoid(W2 @ relu(W1 @ mean_hw(x) + b1) + b2)."""
    h = pl.program_id(1)

    @pl.when(h == 0)
    def _():
        acc_ref[...] = jnp.zeros_like(acc_ref)

    x = x_ref[0]                                                         # (C, hw_t), native dtype
    ones = jnp.ones((x.shape[-1], 1), dtype=x.dtype)
    acc_ref[...] += jnp.dot(x, ones, preferred_element_type=jnp.float32)  # MXU reduction

    @pl.when(h == pl.num_programs(1) - 1)
    def _():
        mean = acc_ref[...] * (1.0 / hw_total)                           # (C, 1)
        z = jnp.dot(w1_ref[...], mean, preferred_element_type=jnp.float32) + b1_ref[...]
        z = jnp.maximum(z, 0.0)
        g = jnp.dot(w2_ref[...], z, preferred_element_type=jnp.float32) + b2_ref[...]
        g_ref[0] = jax.nn.sigmoid(g)


def _scale_kernel(x_ref, ws_ref, g_ref, o_ref):
    """Two-pass path, pass 2: out = x * (sigmoid(ws . x_channels) + g_channel)."""
    x = x_ref[0]                                                         # (C, hw_t), native dtype
    s = jax.nn.sigmoid(
        jnp.dot(ws_ref[...], x, preferred_element_type=jnp.float32))     # (1, hw_t)
    scale = s.astype(x.dtype) + g_ref[0].astype(x.dtype)                 # (C, hw_t)
    o_ref[0] = (x * scale).astype(o_ref.dtype)


# ---------------------------------------------------------------------------
# Wrapper
# ---------------------------------------------------------------------------

def _round_up(n, m):
    return ((n + m - 1) // m) * m


def _vmem_capacity_bytes():
    try:
        return int(pltpu.get_tpu_info().vmem_capacity_bytes)
    except Exception:
        return 64 << 20      # conservative fallback: v7x physical VMEM per TensorCore


def scse_pallas(x, ws, w1, b1, w2, b2, *, force_two_pass=False):
    """x: (B,C,H,W); ws: (1,C,1,1); w1: (Cr,C,1,1); b1: (Cr,); w2: (C,Cr,1,1); b2: (C,)."""
    B, C, H, W = x.shape
    HW = H * W
    Cr = w1.shape[0]

    # Flatten the 1x1-conv weights with jnp ops only (jit/grad friendly).
    ws_row = jnp.reshape(ws, (1, C)).astype(x.dtype)     # native dtype -> native MXU matmul
    w1_m = jnp.reshape(w1, (Cr, C)).astype(jnp.float32)
    b1_c = jnp.reshape(b1, (Cr, 1)).astype(jnp.float32)
    w2_m = jnp.reshape(w2, (C, Cr)).astype(jnp.float32)
    b2_c = jnp.reshape(b2, (C, 1)).astype(jnp.float32)

    itemsize = int(jnp.dtype(x.dtype).itemsize)
    x_flat = x.reshape(B, C, HW)

    # Generation-aware VMEM budget: keep headroom below physical VMEM so Pallas-internal buffers
    # and double-buffering never hit the ceiling (~50 MiB on v7x's 64 MiB, ~100 MiB on v5e/v6e).
    vmem_phys = _vmem_capacity_bytes()
    vmem_cap = min(int(vmem_phys * 0.78), vmem_phys - (12 << 20))

    # ---------------- fused single-pass path ----------------
    hw_p128 = _round_up(HW, 128)
    slab_bytes = C * hw_p128 * itemsize
    # Double-buffered in + out slabs + one in-kernel scale temp + small f32 vectors.
    fused_need = 5 * slab_bytes + 8 * hw_p128 + (2 << 20)

    if (not force_two_pass) and fused_need <= vmem_cap:
        hw_p = hw_p128
        if hw_p != HW:
            x_flat = jnp.pad(x_flat, ((0, 0), (0, 0), (0, hw_p - HW)))
        out_flat = pl.pallas_call(
            functools.partial(_fused_kernel, float(HW)),
            out_shape=jax.ShapeDtypeStruct((B, C, hw_p), x.dtype),
            grid=(B,),
            in_specs=[
                pl.BlockSpec((1, C, hw_p), lambda b: (b, 0, 0)),
                pl.BlockSpec((1, C), lambda b: (0, 0)),
                pl.BlockSpec((Cr, C), lambda b: (0, 0)),
                pl.BlockSpec((Cr, 1), lambda b: (0, 0)),
                pl.BlockSpec((C, Cr), lambda b: (0, 0)),
                pl.BlockSpec((C, 1), lambda b: (0, 0)),
            ],
            out_specs=pl.BlockSpec((1, C, hw_p), lambda b: (b, 0, 0)),
            compiler_params=pltpu.CompilerParams(
                dimension_semantics=("parallel",),
                vmem_limit_bytes=int(min(max(fused_need + (4 << 20), 32 << 20), vmem_cap))),
        )(x_flat, ws_row, w1_m, b1_c, w2_m, b2_c)
        return out_flat[:, :, :HW].reshape(B, C, H, W)

    # ---------------- two-pass fallback (slab too large for VMEM) ----------------
    # Tile budget per generation: larger tiles on 128 MiB parts (v5e/v6e), tighter on v7x.
    max_tile_bytes = (12 << 20) if vmem_phys >= (96 << 20) else (6 << 20)
    hw_t = max(128, min(hw_p128, (max_tile_bytes // max(C * itemsize, 1)) // 128 * 128))
    hw_p = _round_up(HW, hw_t)
    n_hw = hw_p // hw_t
    if hw_p != HW:
        x_flat = jnp.pad(x_flat, ((0, 0), (0, 0), (0, hw_p - HW)))

    tile_bytes = C * hw_t * itemsize
    # Pass 1: 2x input tile (double-buffered) + tiny weights/acc.  No full-tile intermediates.
    pass1_limit = int(min(max(2 * tile_bytes + (4 << 20), 32 << 20), vmem_cap))
    # Pass 2: 2x(in + out) tiles + one in-kernel scale temp (input dtype).
    pass2_limit = int(min(max(5 * tile_bytes + (4 << 20), 32 << 20), vmem_cap))

    # TODO(synk): on v7x with B==1 split the hw reduction over a size-2 "parallel" axis so the
    # second TensorCore gets pass-1 work; omitted here for simplicity.
    gate = pl.pallas_call(
        functools.partial(_gate_kernel, float(HW)),
        out_shape=jax.ShapeDtypeStruct((B, C, 1), jnp.float32),
        grid=(B, n_hw),
        in_specs=[
            pl.BlockSpec((1, C, hw_t), lambda b, h: (b, 0, h)),
            pl.BlockSpec((Cr, C), lambda b, h: (0, 0)),
            pl.BlockSpec((Cr, 1), lambda b, h: (0, 0)),
            pl.BlockSpec((C, Cr), lambda b, h: (0, 0)),
            pl.BlockSpec((C, 1), lambda b, h: (0, 0)),
        ],
        out_specs=pl.BlockSpec((1, C, 1), lambda b, h: (b, 0, 0)),
        scratch_shapes=[pltpu.VMEM((C, 1), jnp.float32)],
        compiler_params=pltpu.CompilerParams(
            dimension_semantics=("parallel", "arbitrary"),
            vmem_limit_bytes=pass1_limit),
    )(x_flat, w1_m, b1_c, w2_m, b2_c)

    out_flat = pl.pallas_call(
        _scale_kernel,
        out_shape=jax.ShapeDtypeStruct((B, C, hw_p), x.dtype),
        grid=(B, n_hw),
        in_specs=[
            pl.BlockSpec((1, C, hw_t), lambda b, h: (b, 0, h)),
            pl.BlockSpec((1, C), lambda b, h: (0, 0)),
            pl.BlockSpec((1, C, 1), lambda b, h: (b, 0, 0)),
        ],
        out_specs=pl.BlockSpec((1, C, hw_t), lambda b, h: (b, 0, h)),
        compiler_params=pltpu.CompilerParams(
            dimension_semantics=("parallel", "parallel"),
            vmem_limit_bytes=pass2_limit),
    )(x_flat, ws_row, gate)

    return out_flat[:, :, :HW].reshape(B, C, H, W)


# ---------------------------------------------------------------------------
# Pure-JAX reference (verification)
# ---------------------------------------------------------------------------

def scse_ref(x, ws, w1, b1, w2, b2):
    B, C, H, W = x.shape
    Cr = w1.shape[0]
    # Spatial branch.
    s = jax.nn.sigmoid(jnp.einsum("bchw,c->bhw", x, ws.reshape(C)))[:, None, :, :]
    satt = x * s
    # Channel branch.
    m = x.mean(axis=(2, 3))                                            # (B, C)
    z = jnp.maximum(m @ w1.reshape(Cr, C).T + b1.reshape(1, Cr), 0.0)  # (B, Cr)
    g = jax.nn.sigmoid(z @ w2.reshape(C, Cr).T + b2.reshape(1, C))     # (B, C)
    catt = x * g[:, :, None, None]
    return satt + catt


if __name__ == "__main__":
    def check(B, C, H, W, reduction=4, force_two_pass=False, seed=0):
        Cr = max(C // reduction, 1)
        key = jax.random.PRNGKey(seed)
        kx, k1, k2, k3, k4, k5 = jax.random.split(key, 6)
        x = jax.random.normal(kx, (B, C, H, W), dtype=jnp.float32)
        ws = 0.3 * jax.random.normal(k1, (1, C, 1, 1), dtype=jnp.float32)   # spatial squeeze
        w1 = 0.3 * jax.random.normal(k2, (Cr, C, 1, 1), dtype=jnp.float32)  # GAB conv1 weight
        b1 = 0.1 * jax.random.normal(k3, (Cr,), dtype=jnp.float32)          # GAB conv1 bias
        w2 = 0.3 * jax.random.normal(k4, (C, Cr, 1, 1), dtype=jnp.float32)  # GAB conv2 weight
        b2 = 0.1 * jax.random.normal(k5, (C,), dtype=jnp.float32)           # GAB conv2 bias

        fn = jax.jit(functools.partial(scse_pallas, force_two_pass=force_two_pass))
        out = jax.block_until_ready(fn(x, ws, w1, b1, w2, b2))
        ref = scse_ref(x, ws, w1, b1, w2, b2)
        np.testing.assert_allclose(np.asarray(out), np.asarray(ref), rtol=1e-5, atol=1e-5)

    check(2, 8, 16, 16)                          # fused single-pass path
    check(2, 8, 16, 16, force_two_pass=True)     # two-pass fallback path
    check(1, 8, 10, 10, seed=1)                  # non-multiple-of-128 spatial (zero padding)
    print("KERNEL_OK")
</pallas_src>

<mosaic_0001>
module attributes {stable_mosaic.version = 11 : i64} {
  func.func @_fused_kernel(%arg0: i32, %arg1: memref<1x8x256xf32, #tpu.memory_space<vmem>>, %arg2: memref<1x8xf32, #tpu.memory_space<vmem>>, %arg3: memref<2x8xf32, #tpu.memory_space<vmem>>, %arg4: memref<2x1xf32, #tpu.memory_space<vmem>>, %arg5: memref<8x2xf32, #tpu.memory_space<vmem>>, %arg6: memref<8x1xf32, #tpu.memory_space<vmem>>, %arg7: memref<1x8x256xf32, #tpu.memory_space<vmem>>) attributes {dimension_semantics = [#tpu.dimension_semantics<parallel>], iteration_bounds = array<i64: 2>, scalar_prefetch = 0 : i64, scratch_operands = 0 : i64, tpu.core_type = #tpu.core_type<tc>, window_params = [{transform_indices = @transform_0, window_bounds = array<i64: 1, 8, 256>}, {pipeline_mode = #tpu.pipeline_mode<synchronous>, transform_indices = @transform_1, window_bounds = array<i64: 1, 8>}, {pipeline_mode = #tpu.pipeline_mode<synchronous>, transform_indices = @transform_2, window_bounds = array<i64: 2, 8>}, {pipeline_mode = #tpu.pipeline_mode<synchronous>, transform_indices = @transform_3, window_bounds = array<i64: 2, 1>}, {pipeline_mode = #tpu.pipeline_mode<synchronous>, transform_indices = @transform_4, window_bounds = array<i64: 8, 2>}, {pipeline_mode = #tpu.pipeline_mode<synchronous>, transform_indices = @transform_5, window_bounds = array<i64: 8, 1>}, {transform_indices = @transform_6, window_bounds = array<i64: 1, 8, 256>}]} {
    %c0 = arith.constant 0 : index
    %c0_0 = arith.constant 0 : index
    %c0_1 = arith.constant 0 : index
    %0 = vector.load %arg1[%c0, %c0_0, %c0_1] : memref<1x8x256xf32, #tpu.memory_space<vmem>>, vector<1x8x256xf32>
    %1 = vector.shape_cast %0 : vector<1x8x256xf32> to vector<8x256xf32>
    %cst = arith.constant 1.000000e+00 : f32
    %2 = vector.broadcast %cst : f32 to vector<256x1xf32>
    %cst_2 = arith.constant dense<0.000000e+00> : vector<8x1xf32>
    %3 = tpu.matmul %1, %2, %cst_2 {dimension_numbers = #tpu.dot_dimension_numbers<[1], [0], [0], [1], [0, 0, 1, 1], [], []>} : vector<8x256xf32>, vector<256x1xf32>, vector<8x1xf32> -> vector<8x1xf32>
    %cst_3 = arith.constant 3.906250e-03 : f32
    %4 = vector.broadcast %cst_3 : f32 to vector<8x1xf32>
    %5 = arith.mulf %3, %4 : vector<8x1xf32>
    %c0_4 = arith.constant 0 : index
    %c0_5 = arith.constant 0 : index
    %6 = vector.load %arg3[%c0_4, %c0_5] : memref<2x8xf32, #tpu.memory_space<vmem>>, vector<2x8xf32>
    %cst_6 = arith.constant dense<0.000000e+00> : vector<2x1xf32>
    %7 = tpu.matmul %6, %5, %cst_6 {dimension_numbers = #tpu.dot_dimension_numbers<[1], [0], [0], [1], [0, 0, 1, 1], [], []>} : vector<2x8xf32>, vector<8x1xf32>, vector<2x1xf32> -> vector<2x1xf32>
    %c0_7 = arith.constant 0 : index
    %c0_8 = arith.constant 0 : index
    %8 = vector.load %arg4[%c0_7, %c0_8] : memref<2x1xf32, #tpu.memory_space<vmem>>, vector<2x1xf32>
    %9 = arith.addf %7, %8 : vector<2x1xf32>
    %cst_9 = arith.constant 0.000000e+00 : f32
    %10 = vector.broadcast %cst_9 : f32 to vector<2x1xf32>
    %11 = arith.maximumf %9, %10 : vector<2x1xf32>
    %c0_10 = arith.constant 0 : index
    %c0_11 = arith.constant 0 : index
    %12 = vector.load %arg5[%c0_10, %c0_11] : memref<8x2xf32, #tpu.memory_space<vmem>>, vector<8x2xf32>
    %cst_12 = arith.constant dense<0.000000e+00> : vector<8x1xf32>
    %13 = tpu.matmul %12, %11, %cst_12 {dimension_numbers = #tpu.dot_dimension_numbers<[1], [0], [0], [1], [0, 0, 1, 1], [], []>} : vector<8x2xf32>, vector<2x1xf32>, vector<8x1xf32> -> vector<8x1xf32>
    %c0_13 = arith.constant 0 : index
    %c0_14 = arith.constant 0 : index
    %14 = vector.load %arg6[%c0_13, %c0_14] : memref<8x1xf32, #tpu.memory_space<vmem>>, vector<8x1xf32>
    %15 = arith.addf %13, %14 : vector<8x1xf32>
    %16 = arith.negf %15 : vector<8x1xf32>
    %17 = math.exp %16 : vector<8x1xf32>
    %cst_15 = arith.constant 1.000000e+00 : f32
    %18 = vector.broadcast %cst_15 : f32 to vector<8x1xf32>
    %19 = arith.addf %18, %17 : vector<8x1xf32>
    %20 = arith.divf %18, %19 : vector<8x1xf32>
    %c0_16 = arith.constant 0 : index
    %c0_17 = arith.constant 0 : index
    %21 = vector.load %arg2[%c0_16, %c0_17] : memref<1x8xf32, #tpu.memory_space<vmem>>, vector<1x8xf32>
    %cst_18 = arith.constant dense<0.000000e+00> : vector<1x256xf32>
    %22 = tpu.matmul %21, %1, %cst_18 {dimension_numbers = #tpu.dot_dimension_numbers<[1], [0], [0], [1], [0, 0, 1, 1], [], []>} : vector<1x8xf32>, vector<8x256xf32>, vector<1x256xf32> -> vector<1x256xf32>
    %23 = arith.negf %22 : vector<1x256xf32>
    %24 = math.exp %23 : vector<1x256xf32>
    %cst_19 = arith.constant 1.000000e+00 : f32
    %25 = vector.broadcast %cst_19 : f32 to vector<1x256xf32>
    %26 = arith.addf %25, %24 : vector<1x256xf32>
    %27 = arith.divf %25, %26 : vector<1x256xf32>
    %28 = vector.broadcast %27 : vector<1x256xf32> to vector<8x256xf32>
    %29 = vector.broadcast %20 : vector<8x1xf32> to vector<8x256xf32>
    %30 = arith.addf %28, %29 : vector<8x256xf32>
    %31 = arith.mulf %1, %30 : vector<8x256xf32>
    %c0_20 = arith.constant 0 : index
    %c0_21 = arith.constant 0 : index
    %c0_22 = arith.constant 0 : index
    %32 = vector.load %arg7[%c0_20, %c0_21, %c0_22] : memref<1x8x256xf32, #tpu.memory_space<vmem>>, vector<1x8x256xf32>
    %33 = vector.shape_cast %32 : vector<1x8x256xf32> to vector<8x256xf32>
    %34 = vector.shape_cast %31 : vector<8x256xf32> to vector<1x8x256xf32>
    tpu.vector_store %arg7[%c0_20, %c0_21, %c0_22], %34 {strides = array<i32>} : memref<1x8x256xf32, #tpu.memory_space<vmem>>, vector<1x8x256xf32>,
    return
  }
  func.func @transform_0(%arg0: i32) -> (i32, i32, i32) {
    %c0_i32 = arith.constant 0 : i32
    %c0_i32_0 = arith.constant 0 : i32
    %c0_i32_1 = arith.constant 0 : i32
    return %arg0, %c0_i32, %c0_i32_0 : i32, i32, i32
  }
  func.func @transform_1(%arg0: i32) -> (i32, i32) {
    %c0_i32 = arith.constant 0 : i32
    %c0_i32_0 = arith.constant 0 : i32
    %c0_i32_1 = arith.constant 0 : i32
    return %c0_i32, %c0_i32_0 : i32, i32
  }
  func.func @transform_2(%arg0: i32) -> (i32, i32) {
    %c0_i32 = arith.constant 0 : i32
    %c0_i32_0 = arith.constant 0 : i32
    %c0_i32_1 = arith.constant 0 : i32
    return %c0_i32, %c0_i32_0 : i32, i32
  }
  func.func @transform_3(%arg0: i32) -> (i32, i32) {
    %c0_i32 = arith.constant 0 : i32
    %c0_i32_0 = arith.constant 0 : i32
    %c0_i32_1 = arith.constant 0 : i32
    return %c0_i32, %c0_i32_0 : i32, i32
  }
  func.func @transform_4(%arg0: i32) -> (i32, i32) {
    %c0_i32 = arith.constant 0 : i32
    %c0_i32_0 = arith.constant 0 : i32
    %c0_i32_1 = arith.constant 0 : i32
    return %c0_i32, %c0_i32_0 : i32, i32
  }
  func.func @transform_5(%arg0: i32) -> (i32, i32) {
    %c0_i32 = arith.constant 0 : i32
    %c0_i32_0 = arith.constant 0 : i32
    %c0_i32_1 = arith.constant 0 : i32
    return %c0_i32, %c0_i32_0 : i32, i32
  }
  func.func @transform_6(%arg0: i32) -> (i32, i32, i32) {
    %c0_i32 = arith.constant 0 : i32
    %c0_i32_0 = arith.constant 0 : i32
    %c0_i32_1 = arith.constant 0 : i32
    return %arg0, %c0_i32, %c0_i32_0 : i32, i32, i32
  }
}

</mosaic_0001>

<llo_original>
// kernel: scse_pallas.1
$region0: #{scse_pallas.1}
  #allocation0 [shape = 'u32[]', space=smem, size = 0x4, offset = 0x4, fixed_abs, tag = 'smem constant byte address 0x4 - core index']
  #allocation1 [shape = 'u32[72,128]{1,0:T(1,128)}', space=vmem, size = 0x9000, scoped, tag = 'internal scratch']
  %s0 = inlined_call_operand.vmem [shape: f32[2,8,256], index: 0, kind: input, shape index: {}]
  %s1 = inlined_call_operand.vmem [shape: f32[1,8], index: 1, kind: input, shape index: {}]
  %s2 = inlined_call_operand.vmem [shape: f32[2,8], index: 2, kind: input, shape index: {}]
  %s3 = inlined_call_operand.vmem [shape: f32[2,1], index: 3, kind: input, shape index: {}]
  %s4 = inlined_call_operand.vmem [shape: f32[8,2], index: 4, kind: input, shape index: {}]
  %s5 = inlined_call_operand.vmem [shape: f32[8,1], index: 5, kind: input, shape index: {}]
  %s6 = inlined_call_operand.vmem [shape: f32[2,8,256], index: 6, kind: output, shape index: {}]
  %s7 = sld [smem:[#allocation0]]
  $region57: #{scse_pallas.1} parent=0
    _
  %s9 = ssub.s32 1, %s7
  %s10 = scalar_select 0, %s9, %s7
  loop: start=0, step=1, limit=4
  $region2: #{scse_pallas.1} parent=0 // loop_pre_header
    _
  $region3: #{scse_pallas.1} parent=0 // loop_header
    %s12 = sphi 0, %s16
    %p13 = scmp.ge.s32.totalorder %s12, 4
    %s22 = sphi 0, %s24
    %s25 = sphi 0, %s22
    %s26 = sphi 0, %s25
    %s42 = sphi 0, %s26
    %s46 = sphi 0, %s46
    %s48 = sphi 0, %s46
    %s49 = sphi 0, %s48
    %s63 = sphi 0, %s49
    %s67 = sphi 0, %s67
    %s69 = sphi 0, %s67
    %s70 = sphi 0, %s69
    %s84 = sphi 0, %s70
    %s88 = sphi 0, %s88
    %s90 = sphi 0, %s88
    %s91 = sphi 0, %s90
    %s105 = sphi 0, %s91
    %s109 = sphi 0, %s109
    %s111 = sphi 0, %s109
    %s112 = sphi 0, %s111
    %s126 = sphi 0, %s112
    %s130 = sphi 0, %s130
    %s132 = sphi 0, %s130
    %s133 = sphi 0, %s132
    %s147 = sphi 0, %s133
    %s153 = sphi 0, %s155
    %s156 = sphi 0, %s153
    %s157 = sphi 0, %s156
    %s173 = sphi 0, %s157
  $region4: #{scse_pallas.1} parent=0 // loop_header_branch
    %15 = sbr.rel (%p13) target = $region8
  $region5: #{scse_pallas.1} parent=0 // loop_body
    %s17 = ssub.s32 %s12, 1
    %s18 = ssub.s32 %s12, 2
    %s19 = sadd.s32 %s12, 1
    %s20 = ssub.s32 %s12, %s19
    %p21 = scmp.eq.s32.totalorder %s20, 0
    %s23 = sadd.s32 %s22, 1
    %s24 = scalar_select %p21, %s22, %s23
    %p27 = pneg %p21
    %p28 = scmp.eq.s32.totalorder %s12, 1
    %p29 = por %p27, %p28
    %p30 = scmp.ne.s32.totalorder %s22, %s25
    %p31 = scmp.eq.s32.totalorder %s12, 0
    %p32 = por %p30, %p31
    %p33 = scmp.ne.s32.totalorder %s22, %s25
    %p34 = scmp.eq.s32.totalorder %s17, 1
    %p35 = por %p33, %p34
    %p36 = scmp.ne.s32.totalorder %s25, %s26
    %p37 = scmp.eq.s32.totalorder %s17, 0
    %p38 = por %p36, %p37
    %p39 = scmp.ne.s32.totalorder %s25, %s26
    %p40 = scmp.eq.s32.totalorder %s18, 1
    %p41 = por %p39, %p40
    %p43 = scmp.ne.s32.totalorder %s26, %s42
    %p44 = scmp.eq.s32.totalorder %s18, 0
    %p45 = por %p43, %p44
    %s47 = sadd.s32 %s46, 1
    %p50 = scmp.eq.s32.totalorder %s12, 1
    %p51 = scmp.ne.s32.totalorder %s46, %s48
    %p52 = scmp.eq.s32.totalorder %s12, 0
    %p53 = por %p51, %p52
    %p54 = scmp.ne.s32.totalorder %s46, %s48
    %p55 = scmp.eq.s32.totalorder %s17, 1
    %p56 = por %p54, %p55
    %p57 = scmp.ne.s32.totalorder %s48, %s49
    %p58 = scmp.eq.s32.totalorder %s17, 0
    %p59 = por %p57, %p58
    %p60 = scmp.ne.s32.totalorder %s48, %s49
    %p61 = scmp.eq.s32.totalorder %s18, 1
    %p62 = por %p60, %p61
    %p64 = scmp.ne.s32.totalorder %s49, %s63
    %p65 = scmp.eq.s32.totalorder %s18, 0
    %p66 = por %p64, %p65
    %s68 = sadd.s32 %s67, 1
    %p71 = scmp.eq.s32.totalorder %s12, 1
    %p72 = scmp.ne.s32.totalorder %s67, %s69
    %p73 = scmp.eq.s32.totalorder %s12, 0
    %p74 = por %p72, %p73
    %p75 = scmp.ne.s32.totalorder %s67, %s69
    %p76 = scmp.eq.s32.totalorder %s17, 1
    %p77 = por %p75, %p76
    %p78 = scmp.ne.s32.totalorder %s69, %s70
    %p79 = scmp.eq.s32.totalorder %s17, 0
    %p80 = por %p78, %p79
    %p81 = scmp.ne.s32.totalorder %s69, %s70
    %p82 = scmp.eq.s32.totalorder %s18, 1
    %p83 = por %p81, %p82
    %p85 = scmp.ne.s32.totalorder %s70, %s84
    %p86 = scmp.eq.s32.totalorder %s18, 0
    %p87 = por %p85, %p86
    %s89 = sadd.s32 %s88, 1
    %p92 = scmp.eq.s32.totalorder %s12, 1
    %p93 = scmp.ne.s32.totalorder %s88, %s90
    %p94 = scmp.eq.s32.totalorder %s12, 0
    %p95 = por %p93, %p94
    %p96 = scmp.ne.s32.totalorder %s88, %s90
    %p97 = scmp.eq.s32.totalorder %s17, 1
    %p98 = por %p96, %p97
    %p99 = scmp.ne.s32.totalorder %s90, %s91
    %p100 = scmp.eq.s32.totalorder %s17, 0
    %p101 = por %p99, %p100
    %p102 = scmp.ne.s32.totalorder %s90, %s91
    %p103 = scmp.eq.s32.totalorder %s18, 1
    %p104 = por %p102, %p103
    %p106 = scmp.ne.s32.totalorder %s91, %s105
    %p107 = scmp.eq.s32.totalorder %s18, 0
    %p108 = por %p106, %p107
    %s110 = sadd.s32 %s109, 1
    %p113 = scmp.eq.s32.totalorder %s12, 1
    %p114 = scmp.ne.s32.totalorder %s109, %s111
    %p115 = scmp.eq.s32.totalorder %s12, 0
    %p116 = por %p114, %p115
    %p117 = scmp.ne.s32.totalorder %s109, %s111
    %p118 = scmp.eq.s32.totalorder %s17, 1
    %p119 = por %p117, %p118
    %p120 = scmp.ne.s32.totalorder %s111, %s112
    %p121 = scmp.eq.s32.totalorder %s17, 0
    %p122 = por %p120, %p121
    %p123 = scmp.ne.s32.totalorder %s111, %s112
    %p124 = scmp.eq.s32.totalorder %s18, 1
    %p125 = por %p123, %p124
    %p127 = scmp.ne.s32.totalorder %s112, %s126
    %p128 = scmp.eq.s32.totalorder %s18, 0
    %p129 = por %p127, %p128
    %s131 = sadd.s32 %s130, 1
    %p134 = scmp.eq.s32.totalorder %s12, 1
    %p135 = scmp.ne.s32.totalorder %s130, %s132
    %p136 = scmp.eq.s32.totalorder %s12, 0
    %p137 = por %p135, %p136
    %p138 = scmp.ne.s32.totalorder %s130, %s132
    %p139 = scmp.eq.s32.totalorder %s17, 1
    %p140 = por %p138, %p139
    %p141 = scmp.ne.s32.totalorder %s132, %s133
    %p142 = scmp.eq.s32.totalorder %s17, 0
    %p143 = por %p141, %p142
    %p144 = scmp.ne.s32.totalorder %s132, %s133
    %p145 = scmp.eq.s32.totalorder %s18, 1
    %p146 = por %p144, %p145
    %p148 = scmp.ne.s32.totalorder %s133, %s147
    %p149 = scmp.eq.s32.totalorder %s18, 0
    %p150 = por %p148, %p149
    %s151 = ssub.s32 %s12, %s19
    %p152 = scmp.eq.s32.totalorder %s151, 0
    %s154 = sadd.s32 %s153, 1
    %s155 = scalar_select %p152, %s153, %s154
    %p158 = pneg %p152
    %p159 = scmp.eq.s32.totalorder %s12, 1
    %p160 = por %p158, %p159
    %p161 = scmp.ne.s32.totalorder %s153, %s156
    %p162 = scmp.eq.s32.totalorder %s12, 0
    %p163 = por %p161, %p162
    %p164 = scmp.ne.s32.totalorder %s153, %s156
    %p165 = scmp.eq.s32.totalorder %s17, 1
    %p166 = por %p164, %p165
    %p167 = scmp.ne.s32.totalorder %s156, %s157
    %p168 = scmp.eq.s32.totalorder %s17, 0
    %p169 = por %p167, %p168
    %p170 = scmp.ne.s32.totalorder %s156, %s157
    %p171 = scmp.eq.s32.totalorder %s18, 1
    %p172 = por %p170, %p171
    %p174 = scmp.ne.s32.totalorder %s157, %s173
    %p175 = scmp.eq.s32.totalorder %s18, 0
    %p176 = por %p174, %p175
    %p177 = scmp.le.s32.totalorder 1, %s12
    %p178 = scmp.lt.s32.totalorder %s12, 3
    %p179 = pnand %p177, %p178
    %p180 = pneg %p179
    // Predicated region
    $region9: #{scse_pallas.1} parent=5 // pred_check
      _
    $region10: #{scse_pallas.1} parent=5 // pred_check_branch
      %182 = sbr.rel (%p179) target = $region12
    $region11: #{scse_pallas.1} parent=5 // pred_region
      %s183 = ssub.s32 %s12, 1
      // Predicated region
      $region13: #{scse_pallas.1} parent=11 // pred_check
        %p184 = pneg %p59
      $region14: #{scse_pallas.1} parent=11 // pred_check_branch
        %186 = sbr.rel (%p184) target = $region16
      $region15: #{scse_pallas.1} parent=11 // pred_region
        _
      $region16: #{scse_pallas.1} parent=11 // pred_fallthru
        _
      // Predicated region
      $region17: #{scse_pallas.1} parent=11 // pred_check
        %p187 = pneg %p80
      $region18: #{scse_pallas.1} parent=11 // pred_check_branch
        %189 = sbr.rel (%p187) target = $region20
      $region19: #{scse_pallas.1} parent=11 // pred_region
        _
      $region20: #{scse_pallas.1} parent=11 // pred_fallthru
        _
      // Predicated region
      $region21: #{scse_pallas.1} parent=11 // pred_check
        %p190 = pneg %p101
      $region22: #{scse_pallas.1} parent=11 // pred_check_branch
        %192 = sbr.rel (%p190) target = $region24
      $region23: #{scse_pallas.1} parent=11 // pred_region
        _
      $region24: #{scse_pallas.1} parent=11 // pred_fallthru
        _
      // Predicated region
      $region25: #{scse_pallas.1} parent=11 // pred_check
        %p193 = pneg %p122
      $region26: #{scse_pallas.1} parent=11 // pred_check_branch
        %195 = sbr.rel (%p193) target = $region28
      $region27: #{scse_pallas.1} parent=11 // pred_region
        _
      $region28: #{scse_pallas.1} parent=11 // pred_fallthru
        _
      // Predicated region
      $region29: #{scse_pallas.1} parent=11 // pred_check
        %p196 = pneg %p143
      $region30: #{scse_pallas.1} parent=11 // pred_check_branch
        %198 = sbr.rel (%p196) target = $region32
      $region31: #{scse_pallas.1} parent=11 // pred_region
        _
      $region32: #{scse_pallas.1} parent=11 // pred_fallthru
        _
    $region12: #{scse_pallas.1} parent=5 // pred_fallthru
      _
    %p199 = scmp.lt.s32.totalorder %s12, 2
    // Predicated region
    $region33: #{scse_pallas.1} parent=5 // pred_check
      %p200 = pneg %p199
    $region34: #{scse_pallas.1} parent=5 // pred_check_branch
      %202 = sbr.rel (%p200) target = $region36
    $region35: #{scse_pallas.1} parent=5 // pred_region
      // Predicated region
      $region37: #{scse_pallas.1} parent=35 // pred_check
        %p203 = pneg %p32
      $region38: #{scse_pallas.1} parent=35 // pred_check_branch
        %205 = sbr.rel (%p203) target = $region40
      $region39: #{scse_pallas.1} parent=35 // pred_region
        %p206 = scmp.lt.s32.totalorder %s12, 1
        %s207 = scalar_select %p206, %s12, 1
        %s208 = smul.addr %s207, 2
        %s209 = smul.addr %s208, 8
        %s210 = scalar_lea.vmem %s0, %s209
      $region40: #{scse_pallas.1} parent=35 // pred_fallthru
        _
    $region36: #{scse_pallas.1} parent=5 // pred_fallthru
      _
    %p211 = scmp.le.s32.totalorder 1, %s12
    %p212 = scmp.lt.s32.totalorder %s12, 3
    %p213 = pnand %p211, %p212
    %p214 = pneg %p213
    // Predicated region
    $region41: #{scse_pallas.1} parent=5 // pred_check
      _
    $region42: #{scse_pallas.1} parent=5 // pred_check_branch
      %216 = sbr.rel (%p213) target = $region44
    $region43: #{scse_pallas.1} parent=5 // pred_region
      %s217 = ssub.s32 %s12, 1
      %p218 = scmp.lt.s32.totalorder %s17, 1
      %s219 = scalar_select %p218, %s17, 1
      %s220 = smul.addr %s219, 2
      %s221 = smul.addr %s220, 8
      %s222 = scalar_lea.vmem %s0, %s221
      %p223 = pneg %p38
      %p224 = pneg %p35
      %p225 = pneg %p59
      %p226 = pneg %p56
      %p227 = pneg %p80
      %p228 = pneg %p77
      %p229 = pneg %p101
      %p230 = pneg %p98
      %p231 = pneg %p122
      %p232 = pneg %p119
      %p233 = pneg %p143
      %p234 = pneg %p140
      %p235 = pneg %p169
      %p236 = pneg %p166
      %p237 = scmp.lt.s32.totalorder %s17, 1
      %s238 = scalar_select %p237, %s17, 1
      %s239 = smul.addr %s238, 2
      %s240 = smul.addr %s239, 8
      %s241 = scalar_lea.vmem %s6, %s240
      %p242 = scmp.lt.s32.totalorder %s17, 1
      %s243 = scalar_select %p242, %s17, 1
      %s244 = smul.addr %s243, 2
      %s245 = smul.addr %s244, 8
      %s246 = scalar_lea.vmem %s0, %s245
      %p247 = scmp.lt.s32.totalorder %s17, 1
      %s248 = scalar_select %p247, %s17, 1
      %s249 = smul.addr %s248, 2
      %s250 = smul.addr %s249, 8
      %s251 = scalar_lea.vmem %s6, %s250
      %v252 = vld [vmem:[%s246] sm:$0xff]
      %v253 = vld [vmem:[%s246 + $0x8] sm:$0xff]
      %254 = vmatpush.msra.mxu0 1.0
      %255 = vmatpush.msra.mxu0 1.0
      %256 = vmatpush.msra.mxu0 1.0
      %257 = vmatpush.msra.mxu0 1.0
      %258 = vmatpush.msra.mxu0 1.0
      %259 = vmatpush.msra.mxu0 1.0
      %260 = vmatpush.msra.mxu0 1.0
      %261 = vmatpush.msra.mxu0 1.0
      %262 = vmatpush.msra.mxu0 1.0
      %263 = vmatpush.msra.mxu0 1.0
      %264 = vmatpush.msra.mxu0 1.0
      %265 = vmatpush.msra.mxu0 1.0
      %266 = vmatpush.msra.mxu0 1.0
      %267 = vmatpush.msra.mxu0 1.0
      %268 = vmatpush.msra.mxu0 1.0
      %269 = vmatpush.msra.mxu0 1.0
      %270 = vmatmul.f32.gmra.mxu0 %v252
      %v271 = vpop.f32.mrf.mxu0
      %v272 = vadd.f32 0.0, %v271
      %273 = vdwg.mxu0
      %274 = vmatpush.msra.mxu0 1.0
      %275 = vmatpush.msra.mxu0 1.0
      %276 = vmatpush.msra.mxu0 1.0
      %277 = vmatpush.msra.mxu0 1.0
      %278 = vmatpush.msra.mxu0 1.0
      %279 = vmatpush.msra.mxu0 1.0
      %280 = vmatpush.msra.mxu0 1.0
      %281 = vmatpush.msra.mxu0 1.0
      %282 = vmatpush.msra.mxu0 1.0
      %283 = vmatpush.msra.mxu0 1.0
      %284 = vmatpush.msra.mxu0 1.0
      %285 = vmatpush.msra.mxu0 1.0
      %286 = vmatpush.msra.mxu0 1.0
      %287 = vmatpush.msra.mxu0 1.0
      %288 = vmatpush.msra.mxu0 1.0
      %289 = vmatpush.msra.mxu0 1.0
      %290 = vmatmul.f32.gmra.mxu0 %v253
      %v291 = vpop.f32.mrf.mxu0
      %v292 = vadd.f32 %v272, %v291
      %293 = vdwg.mxu0
      %v294 = vmul.f32 %v292, 0.00390625
      %v295 = vld [vmem:[%s2] sm:$0x3]
      %v296 = vld [vmem:[%s3] sm:$0x3]
      %vm297 = vcmask 64512
      %v299 = vsel %vm297, %v295, 0
      %301 = vmatpush.msra.mxu0 0.0
      %302 = vmatpush.msra.mxu0 0.0
      %303 = vmatpush.msra.mxu0 0.0
      %304 = vmatpush.msra.mxu0 0.0
      %305 = vmatpush.msra.mxu0 0.0
      %306 = vmatpush.msra.mxu0 0.0
      %307 = vmatpush.msra.mxu0 0.0
      %308 = vmatpush.msra.mxu0 0.0
      %309 = vmatpush.msra.mxu0 0.0
      %310 = vmatpush.msra.mxu0 0.0
      %311 = vmatpush.msra.mxu0 0.0
      %312 = vmatpush.msra.mxu0 0.0
      %313 = vmatpush.msra.mxu0 0.0
      %314 = vmatpush.msra.mxu0 0.0
      %315 = vmatpush.msra.mxu0 0.0
      %316 = vmatpush.msra.mxu0 %v294
      %317 = vmatmul.f32.gmra.mxu0 %v299
      %v318 = vpop.f32.mrf.mxu0
      %v319 = vadd.f32 %v296, %v318
      %320 = vdwg.mxu0
      %v321 = vmax.f32 %v319, 0.0
      %v322 = vld [vmem:[%s4] sm:$0xff]
      %v323 = vld [vmem:[%s5] sm:$0xff]
      %vm324 = vcmask 15360
      %v326 = vsel %vm324, %v322, 0
      %vm328 = vcmask 1041408
      %v330 = vsel %vm328, %v321, 0
      %332 = vmatpush.msra.mxu0 0.0
      %333 = vmatpush.msra.mxu0 0.0
      %334 = vmatpush.msra.mxu0 0.0
      %335 = vmatpush.msra.mxu0 0.0
      %336 = vmatpush.msra.mxu0 0.0
      %337 = vmatpush.msra.mxu0 0.0
      %338 = vmatpush.msra.mxu0 0.0
      %339 = vmatpush.msra.mxu0 0.0
      %340 = vmatpush.msra.mxu0 0.0
      %341 = vmatpush.msra.mxu0 0.0
      %342 = vmatpush.msra.mxu0 0.0
      %343 = vmatpush.msra.mxu0 0.0
      %344 = vmatpush.msra.mxu0 0.0
      %345 = vmatpush.msra.mxu0 0.0
      %346 = vmatpush.msra.mxu0 0.0
      %347 = vmatpush.msra.mxu0 %v330
      %348 = vmatmul.f32.gmra.mxu0 %v326
      %v349 = vpop.f32.mrf.mxu0
      %v350 = vadd.f32 %v323, %v349
      %351 = vdwg.mxu0
      %v352 = vxor.u32 %v350, 2147483648
      %v353 = vmul.f32 %v352, 1.442695
      %v354 = vpow.pop %v353
      %v355 = vadd.f32 %v354, 1.0
      %v356 = vrcp.pop %v355
      %v357 = vmul.f32 %v355, %v356
      %v358 = vsub.f32 1.0, %v357
      %v359 = vmul.f32 %v356, %v358
      %v360 = vadd.f32 %v356, %v359
      %vm361 = vweird.f32 %v355
      %vm362 = vweird.f32 %v356
      %vm363 = vmor %vm361, %vm362
      %v364 = vsel %vm363, %v356, %v360
      %v365 = vand.u32 2147483647, %v355
      %vm366 = vcmp.eq.f32.partialorder %v365, 8.507059e+37
      %v367 = vand.u32 %v355, 2147483648
      %v368 = vor.u32 1.1754944e-38, %v367
      %v369 = vsel %vm366, %v368, %v364
      %v370 = vmul.f32 1.0, %v369
      %v371 = vld [vmem:[%s1] sm:$0x1]
      %v373 = vsel %vm297, %v371, 0
      %375 = vmatpush.msra.mxu0 0.0
      %376 = vmatpush.msra.mxu0 0.0
      %377 = vmatpush.msra.mxu0 0.0
      %378 = vmatpush.msra.mxu0 0.0
      %379 = vmatpush.msra.mxu0 0.0
      %380 = vmatpush.msra.mxu0 0.0
      %381 = vmatpush.msra.mxu0 0.0
      %382 = vmatpush.msra.mxu0 0.0
      %383 = vmatpush.msra.mxu0 0.0
      %384 = vmatpush.msra.mxu0 0.0
      %385 = vmatpush.msra.mxu0 0.0
      %386 = vmatpush.msra.mxu0 0.0
      %387 = vmatpush.msra.mxu0 0.0
      %388 = vmatpush.msra.mxu0 0.0
      %389 = vmatpush.msra.mxu0 0.0
      %390 = vmatpush.msra.mxu0 %v252
      %391 = vmatmul.f32.gmra.mxu0 %v373
      %v392 = vpop.f32.mrf.mxu0
      %v393 = vadd.f32 0.0, %v392
      %394 = vdwg.mxu0
      %395 = vmatpush.msra.mxu0 0.0
      %396 = vmatpush.msra.mxu0 0.0
      %397 = vmatpush.msra.mxu0 0.0
      %398 = vmatpush.msra.mxu0 0.0
      %399 = vmatpush.msra.mxu0 0.0
      %400 = vmatpush.msra.mxu0 0.0
      %401 = vmatpush.msra.mxu0 0.0
      %402 = vmatpush.msra.mxu0 0.0
      %403 = vmatpush.msra.mxu0 0.0
      %404 = vmatpush.msra.mxu0 0.0
      %405 = vmatpush.msra.mxu0 0.0
      %406 = vmatpush.msra.mxu0 0.0
      %407 = vmatpush.msra.mxu0 0.0
      %408 = vmatpush.msra.mxu0 0.0
      %409 = vmatpush.msra.mxu0 0.0
      %410 = vmatpush.msra.mxu0 %v253
      %411 = vmatmul.f32.gmra.mxu0 %v373
      %v412 = vpop.f32.mrf.mxu0
      %v413 = vadd.f32 0.0, %v412
      %414 = vdwg.mxu0
      %v415 = vxor.u32 %v393, 2147483648
      %v416 = vxor.u32 %v413, 2147483648
      %v417 = vmul.f32 %v415, 1.442695
      %v418 = vpow.pop %v417
      %v419 = vmul.f32 %v416, 1.442695
      %v420 = vpow.pop %v419
      %v421 = vadd.f32 %v418, 1.0
      %v422 = vadd.f32 %v420, 1.0
      %v423 = vrcp.pop %v421
      %v424 = vmul.f32 %v421, %v423
      %v425 = vsub.f32 1.0, %v424
      %v426 = vmul.f32 %v423, %v425
      %v427 = vadd.f32 %v423, %v426
      %vm428 = vweird.f32 %v421
      %vm429 = vweird.f32 %v423
      %vm430 = vmor %vm428, %vm429
      %v431 = vsel %vm430, %v423, %v427
      %v432 = vand.u32 2147483647, %v421
      %vm433 = vcmp.eq.f32.partialorder %v432, 8.507059e+37
      %v434 = vand.u32 %v421, 2147483648
      %v435 = vor.u32 1.1754944e-38, %v434
      %v436 = vsel %vm433, %v435, %v431
      %v437 = vmul.f32 1.0, %v436
      %v438 = vrcp.pop %v422
      %v439 = vmul.f32 %v422, %v438
      %v440 = vsub.f32 1.0, %v439
      %v441 = vmul.f32 %v438, %v440
      %v442 = vadd.f32 %v438, %v441
      %vm443 = vweird.f32 %v422
      %vm444 = vweird.f32 %v438
      %vm445 = vmor %vm443, %vm444
      %v446 = vsel %vm445, %v438, %v442
      %v447 = vand.u32 2147483647, %v422
      %vm448 = vcmp.eq.f32.partialorder %v447, 8.507059e+37
      %v449 = vand.u32 %v422, 2147483648
      %v450 = vor.u32 1.1754944e-38, %v449
      %v451 = vsel %vm448, %v450, %v446
      %v452 = vmul.f32 1.0, %v451
      %v453 = vperm.slane %v437, 0
      %v454 = vperm.slane %v452, 0
      %456 = vset.pattern.permute.xlu0 0
      %457 = vperm.xlu0 %456, %v370
      %v458 = vpop.permute.xlu0 %457
      %v460 = vadd.f32 %v453, %v458
      %v461 = vadd.f32 %v454, %v458
      %v462 = vmul.f32 %v252, %v460
      %v463 = vmul.f32 %v253, %v461
      %464 = vst [vmem:[%s251] sm:$0xff] %v462
      %465 = vst [vmem:[%s251 + $0x8] sm:$0xff] %v463
      %p466 = scmp.lt.s32.totalorder %s17, 1
      %s467 = scalar_select %p466, %s17, 1
      %s468 = smul.addr %s467, 2
      %s469 = smul.addr %s468, 8
      %s470 = scalar_lea.vmem %s6, %s469
      // Predicated region
      $region45: #{scse_pallas.1} parent=43 // pred_check
        %p471 = pneg %p166
      $region46: #{scse_pallas.1} parent=43 // pred_check_branch
        %473 = sbr.rel (%p471) target = $region48
      $region47: #{scse_pallas.1} parent=43 // pred_region
        _
      $region48: #{scse_pallas.1} parent=43 // pred_fallthru
        _
    $region44: #{scse_pallas.1} parent=5 // pred_fallthru
      _
    %p474 = scmp.le.s32.totalorder 2, %s12
    // Predicated region
    $region49: #{scse_pallas.1} parent=5 // pred_check
      %p475 = pneg %p474
    $region50: #{scse_pallas.1} parent=5 // pred_check_branch
      %477 = sbr.rel (%p475) target = $region52
    $region51: #{scse_pallas.1} parent=5 // pred_region
      %s478 = ssub.s32 %s12, 2
      // Predicated region
      $region53: #{scse_pallas.1} parent=51 // pred_check
        %p479 = pneg %p172
      $region54: #{scse_pallas.1} parent=51 // pred_check_branch
        %481 = sbr.rel (%p479) target = $region56
      $region55: #{scse_pallas.1} parent=51 // pred_region
        %p482 = scmp.lt.s32.totalorder %s18, 1
        %s483 = scalar_select %p482, %s18, 1
        %s484 = smul.addr %s483, 2
        %s485 = smul.addr %s484, 8
        %s486 = scalar_lea.vmem %s6, %s485
      $region56: #{scse_pallas.1} parent=51 // pred_fallthru
        _
    $region52: #{scse_pallas.1} parent=5 // pred_fallthru
      _
  $region6: #{scse_pallas.1} parent=0 // loop_footer
    %s16 = sadd.s32 1, %s12
  $region7: #{scse_pallas.1} parent=0 // loop_footer_branch
    %11 = sbr.rel target = $region3
  $region8: #{scse_pallas.1} parent=0 // loop_exit
    _

</llo_original>
